<compile_context>
chip_gen: v7x
topology: tpu7x:2x2x1
jax: 0.10.0
libtpu: 0.0.40
codegen_flags: <defaults>
</compile_context>

<pallas_src>
import functools

import jax
import jax.numpy as jnp
from jax.experimental import pallas as pl
from jax.experimental.pallas import tpu as pltpu

_LANES = 128
_MAX_TILE_ROWS = 8192   # (8192, 128) f32 block = 4 MiB; 2 in x 2 bufs = 16 MiB
_SPLIT_ROWS = 4096      # ~2 MiB: above this, force >= 2 grid steps (v7x dual-TC)


def _pick_tile_rows(rows):
    """Static tile-row choice: big blocks, but >= 2 grid steps when worthwhile."""
    if rows < _SPLIT_ROWS:
        return rows                              # single full-extent block
    if rows >= 2 * _MAX_TILE_ROWS:
        return _MAX_TILE_ROWS                    # >= 2 blocks automatically
    # Medium sizes: split into 2 blocks, tile a multiple of 8 sublanes.
    half = -(-rows // 2)
    return min(_MAX_TILE_ROWS, -(-half // 8) * 8)


def _bce_logits_kernel(x_ref, t_ref, o_ref, *, ragged_rows):
    """One (tile_rows, 128) block -> per-lane (1, 128) partial sums."""
    x = x_ref[...].astype(jnp.float32)
    t = t_ref[...].astype(jnp.float32)

    # Numerically stable BCE with logits (same math as torch BCEWithLogitsLoss):
    #   l(x, t) = max(x, 0) - x*t + log1p(exp(-|x|))
    bce = jnp.maximum(x, 0.0) - x * t + jnp.log1p(jnp.exp(-jnp.abs(x)))

    if ragged_rows:
        # Last block is partial: mask garbage rows there only; full blocks
        # take the unmasked path (no extra VALU work per element).
        is_last = pl.program_id(0) == pl.num_programs(0) - 1

        @pl.when(is_last)
        def _():
            r = jax.lax.broadcasted_iota(jnp.int32, bce.shape, 0)
            masked = jnp.where(r < ragged_rows, bce, 0.0)
            o_ref[...] = jnp.sum(masked, axis=0, keepdims=True)

        @pl.when(jnp.logical_not(is_last))
        def _():
            o_ref[...] = jnp.sum(bce, axis=0, keepdims=True)
    else:
        o_ref[...] = jnp.sum(bce, axis=0, keepdims=True)


def bce_with_logits_loss(predictions, targets):
    """Pallas implementation of CustomBCEWithLogitsLoss.forward (scalar f32)."""
    x = jnp.reshape(predictions, (-1,))
    t = jnp.reshape(targets, (-1,))
    n = x.shape[0]

    n_bulk = (n // _LANES) * _LANES
    rows = n_bulk // _LANES

    total = jnp.float32(0.0)

    if rows > 0:
        tile_rows = _pick_tile_rows(rows)
        num_blocks = pl.cdiv(rows, tile_rows)
        ragged_rows = rows % tile_rows  # static; 0 => last block is full

        xb = x if n_bulk == n else x[:n_bulk]
        tb = t if n_bulk == n else t[:n_bulk]
        x2 = xb.reshape(rows, _LANES)
        t2 = tb.reshape(rows, _LANES)

        kernel = functools.partial(_bce_logits_kernel, ragged_rows=ragged_rows)
        in_spec = pl.BlockSpec((tile_rows, _LANES), lambda i: (i, 0))

        partials = pl.pallas_call(
            kernel,
            out_shape=jax.ShapeDtypeStruct((num_blocks, _LANES), jnp.float32),
            grid_spec=pltpu.PrefetchScalarGridSpec(
                num_scalar_prefetch=0,
                grid=(num_blocks,),
                in_specs=[in_spec, in_spec],
                out_specs=pl.BlockSpec((1, _LANES), lambda i: (i, 0)),
            ),
            compiler_params=pltpu.CompilerParams(
                dimension_semantics=("parallel",),
                vmem_limit_bytes=32 << 20,
            ),
        )(x2, t2)

        # Tiny finishing reduction (num_blocks x 128 elements).
        total = total + jnp.sum(partials)

    if n_bulk < n:
        # <128-element lane tail: reduce with plain jnp (O(128) work), no pad.
        xt = x[n_bulk:].astype(jnp.float32)
        tt = t[n_bulk:].astype(jnp.float32)
        tail = jnp.maximum(xt, 0.0) - xt * tt + jnp.log1p(jnp.exp(-jnp.abs(xt)))
        total = total + jnp.sum(tail)

    return total / jnp.float32(n)


def _bce_with_logits_ref(predictions, targets):
    x = jnp.reshape(predictions, (-1,)).astype(jnp.float32)
    t = jnp.reshape(targets, (-1,)).astype(jnp.float32)
    per_elem = jnp.maximum(x, 0.0) - x * t + jnp.log1p(jnp.exp(-jnp.abs(x)))
    return jnp.mean(per_elem)


if __name__ == "__main__":
    key = jax.random.PRNGKey(0)
    k1, k2 = jax.random.split(key)
    # NCHW, matching the PyTorch convention (loss flattens over all elements).
    x = jax.random.normal(k1, (2, 4, 16, 16), dtype=jnp.float32)
    t = (jax.random.uniform(k2, (2, 4, 16, 16)) > 0.5).astype(jnp.float32)

    loss = jax.jit(bce_with_logits_loss)(x, t)
    jax.block_until_ready(loss)

    ref = _bce_with_logits_ref(x, t)
    assert jnp.allclose(loss, ref, rtol=1e-5, atol=1e-5), (loss, ref)
    print("KERNEL_OK")
</pallas_src>

<mosaic_0001>
module attributes {stable_mosaic.version = 11 : i64} {
  func.func @_bce_logits_kernel(%arg0: i32, %arg1: memref<16x128xf32, #tpu.memory_space<vmem>>, %arg2: memref<16x128xf32, #tpu.memory_space<vmem>>, %arg3: memref<1x128xf32, #tpu.memory_space<vmem>>) attributes {dimension_semantics = [#tpu.dimension_semantics<parallel>], iteration_bounds = array<i64: 1>, scalar_prefetch = 0 : i64, scratch_operands = 0 : i64, tpu.core_type = #tpu.core_type<tc>, window_params = [{transform_indices = @transform_0, window_bounds = array<i64: 16, 128>}, {transform_indices = @transform_1, window_bounds = array<i64: 16, 128>}, {transform_indices = @transform_2, window_bounds = array<i64: 1, 128>}]} {
    %c0 = arith.constant 0 : index
    %c0_0 = arith.constant 0 : index
    %0 = vector.load %arg1[%c0, %c0_0] : memref<16x128xf32, #tpu.memory_space<vmem>>, vector<16x128xf32>
    %c0_1 = arith.constant 0 : index
    %c0_2 = arith.constant 0 : index
    %1 = vector.load %arg2[%c0_1, %c0_2] : memref<16x128xf32, #tpu.memory_space<vmem>>, vector<16x128xf32>
    %cst = arith.constant 0.000000e+00 : f32
    %2 = vector.broadcast %cst : f32 to vector<16x128xf32>
    %3 = arith.maximumf %0, %2 : vector<16x128xf32>
    %4 = arith.mulf %0, %1 : vector<16x128xf32>
    %5 = arith.subf %3, %4 : vector<16x128xf32>
    %6 = math.absf %0 : vector<16x128xf32>
    %cst_3 = arith.constant 0.000000e+00 : f32
    %7 = vector.broadcast %cst_3 : f32 to vector<16x128xf32>
    %8 = arith.subf %7, %6 : vector<16x128xf32>
    %9 = math.exp %8 : vector<16x128xf32>
    %10 = math.log1p %9 : vector<16x128xf32>
    %11 = arith.addf %5, %10 : vector<16x128xf32>
    %cst_4 = arith.constant dense<0.000000e+00> : vector<128xf32>
    %12 = vector.multi_reduction <add>, %11, %cst_4 [0] : vector<16x128xf32> to vector<128xf32>
    %13 = vector.shape_cast %12 : vector<128xf32> to vector<1x128xf32>
    %c0_5 = arith.constant 0 : index
    %c0_6 = arith.constant 0 : index
    %14 = vector.load %arg3[%c0_5, %c0_6] : memref<1x128xf32, #tpu.memory_space<vmem>>, vector<1x128xf32>
    tpu.vector_store %arg3[%c0_5, %c0_6], %13 {strides = array<i32>} : memref<1x128xf32, #tpu.memory_space<vmem>>, vector<1x128xf32>,
    return
  }
  func.func @transform_0(%arg0: i32) -> (i32, i32) {
    %c0_i32 = arith.constant 0 : i32
    %c0_i32_0 = arith.constant 0 : i32
    return %arg0, %c0_i32 : i32, i32
  }
  func.func @transform_1(%arg0: i32) -> (i32, i32) {
    %c0_i32 = arith.constant 0 : i32
    %c0_i32_0 = arith.constant 0 : i32
    return %arg0, %c0_i32 : i32, i32
  }
  func.func @transform_2(%arg0: i32) -> (i32, i32) {
    %c0_i32 = arith.constant 0 : i32
    %c0_i32_0 = arith.constant 0 : i32
    return %arg0, %c0_i32 : i32, i32
  }
}

</mosaic_0001>

<llo_original>
// kernel: bce_with_logits_loss.1
$region0: #{bce_with_logits_loss.1}
  #allocation0 [shape = 'u32[]', space=smem, size = 0x4, offset = 0x4, fixed_abs, tag = 'smem constant byte address 0x4 - core index']
  #allocation1 [shape = 'u32[144,128]{1,0:T(1,128)}', space=vmem, size = 0x12000, scoped, tag = 'internal scratch']
  %s0 = inlined_call_operand.vmem [shape: f32[16,128], index: 0, kind: input, shape index: {}]
  %s1 = inlined_call_operand.vmem [shape: f32[16,128], index: 1, kind: input, shape index: {}]
  %s2 = inlined_call_operand.vmem [shape: f32[1,128], index: 2, kind: output, shape index: {}]
  %s3 = sld [smem:[#allocation0]]
  $region18: #{bce_with_logits_loss.1} parent=0
    _
  %s5 = ssub.s32 1, %s3
  %s6 = scalar_select 0, %s5, %s3
  // Predicated region
  $region2: #{bce_with_logits_loss.1} parent=0 // pred_check
    _
  $region3: #{bce_with_logits_loss.1} parent=0 // pred_check_branch
    %8 = sbr.rel (0) target = $region5
  $region4: #{bce_with_logits_loss.1} parent=0 // pred_region
    _
  $region5: #{bce_with_logits_loss.1} parent=0 // pred_fallthru
    _
  // Predicated region
  $region6: #{bce_with_logits_loss.1} parent=0 // pred_check
    _
  $region7: #{bce_with_logits_loss.1} parent=0 // pred_check_branch
    %10 = sbr.rel (0) target = $region9
  $region8: #{bce_with_logits_loss.1} parent=0 // pred_region
    _
  $region9: #{bce_with_logits_loss.1} parent=0 // pred_fallthru
    _
  %v11 = vld [vmem:[%s0] sm:$0xff]
  %v12 = vld [vmem:[%s0 + $0x8] sm:$0xff]
  %v13 = vld [vmem:[%s1] sm:$0xff]
  %v14 = vld [vmem:[%s1 + $0x8] sm:$0xff]
  %v15 = vmax.f32 %v11, 0.0
  %v16 = vmax.f32 %v12, 0.0
  %v17 = vmul.f32 %v11, %v13
  %v18 = vmul.f32 %v12, %v14
  %v19 = vsub.f32 %v15, %v17
  %v20 = vsub.f32 %v16, %v18
  %v21 = vand.u32 2147483647, %v11
  %v22 = vand.u32 2147483647, %v12
  %v23 = vsub.f32 0.0, %v21
  %v24 = vsub.f32 0.0, %v22
  %v25 = vmul.f32 %v23, 1.442695
  %v26 = vpow.pop %v25
  %v27 = vmul.f32 %v24, 1.442695
  %v28 = vpow.pop %v27
  %v29 = vadd.f32 %v26, 1.0
  %v30 = vlog2.pop %v29
  %v31 = vmul.f32 %v30, 0.6931472
  %v32 = vmul.f32 -0.5, %v26
  %v33 = vadd.f32 %v32, 1.0
  %v34 = vmul.f32 %v33, %v26
  %v35 = vand.u32 2147483647, %v26
  %vm36 = vcmp.lt.f32.partialorder %v35, 0.0004427343
  %v37 = vsel %vm36, %v34, %v31
  %v38 = vadd.f32 %v28, 1.0
  %v39 = vlog2.pop %v38
  %v40 = vmul.f32 %v39, 0.6931472
  %v41 = vmul.f32 -0.5, %v28
  %v42 = vadd.f32 %v41, 1.0
  %v43 = vmul.f32 %v42, %v28
  %v44 = vand.u32 2147483647, %v28
  %vm45 = vcmp.lt.f32.partialorder %v44, 0.0004427343
  %v46 = vsel %vm45, %v43, %v40
  %v47 = vadd.f32 %v19, %v37
  %v48 = vadd.f32 %v20, %v46
  %v49 = vadd.f32 %v47, %v48
  %v50 = vrot.slane %v49, 4
  %v51 = vadd.f32 %v49, %v50
  %v52 = vrot.slane %v51, 2
  %v53 = vadd.f32 %v51, %v52
  %v54 = vrot.slane %v53, 1
  %v55 = vadd.f32 %v53, %v54
  %56 = vst [vmem:[%s2] sm:$0x1] %v55
  // Predicated region
  $region10: #{bce_with_logits_loss.1} parent=0 // pred_check
    _
  $region11: #{bce_with_logits_loss.1} parent=0 // pred_check_branch
    %58 = sbr.rel (0) target = $region13
  $region12: #{bce_with_logits_loss.1} parent=0 // pred_region
    _
  $region13: #{bce_with_logits_loss.1} parent=0 // pred_fallthru
    _
  // Predicated region
  $region14: #{bce_with_logits_loss.1} parent=0 // pred_check
    _
  $region15: #{bce_with_logits_loss.1} parent=0 // pred_check_branch
    %60 = sbr.rel (0) target = $region17
  $region16: #{bce_with_logits_loss.1} parent=0 // pred_region
    _
  $region17: #{bce_with_logits_loss.1} parent=0 // pred_fallthru
    _

</llo_original>
